<compile_context>
chip_gen: v7x
topology: tpu7x:2x2x1
jax: 0.10.0
libtpu: 0.0.40
codegen_flags: <defaults>
</compile_context>

<pallas_src>
from functools import partial

import jax
import jax.numpy as jnp
from jax.experimental import pallas as pl
from jax.experimental.pallas import tpu as pltpu

LANE = 128
NODE_CHUNK = 256          # sublane chunk for the pooling reduction


# ----------------------------------------------------------------------------
# Pallas kernel: the whole forward pass for one (small) batched graph.
# ----------------------------------------------------------------------------
def gossipcop_kernel(x_ref,        # [NP, Cp]   bf16 node features
                     adj_ref,      # [NP, NP]   bf16 exact {0,1} adjacency (dst,src)
                     pool_ref,     # [B,  NP]   bf16 exact {0,1} segment mask
                     invdeg_ref,   # [NP, 1]    f32  1/deg row scale
                     wl_ref,       # [Cp, Hp]   bf16 SAGEConv lin_l
                     wx_ref,       # [Cp, 2Hp]  bf16 fused [lin_r | lin0]
                     w1_ref,       # [2Hp, Hp]  bf16 lin1 (rows: pool half | lin half)
                     w2_ref,       # [Hp, Cop]  bf16 lin2
                     b_ref,        # [8, Hmax]  f32  rows 0..3 = bl, b0, b1, b2
                     out_ref,      # [B, Cop]   f32
                     *, num_graphs, node_chunk):
    f32 = jnp.float32
    bf16 = jnp.bfloat16
    Hp = wl_ref.shape[1]
    Cop = w2_ref.shape[1]
    B = num_graphs
    NP = x_ref.shape[0]

    x = x_ref[...]                                                  # [NP, Cp] bf16

    # --- fused x-LHS matmul: x @ [W_r | W_0]  ->  [NP, 2Hp] (bf16 MXU, f32 acc)
    xw = jnp.dot(x, wx_ref[...], preferred_element_type=f32)

    # --- SAGEConv (mean aggr): (A @ x) * 1/deg, then lin_l(.) + lin_r(x), ReLU
    agg = jnp.dot(adj_ref[...], x, preferred_element_type=f32) * invdeg_ref[...]
    h_conv = (jnp.dot(agg.astype(bf16), wl_ref[...], preferred_element_type=f32)
              + xw[:, :Hp] + b_ref[0:1, :Hp])                       # [NP, Hp]
    h_conv = jnp.maximum(h_conv, 0.0)                               # >= 0

    # --- lin0(x).relu()  (only the first B rows feed the concat) ------------
    h_lin = jnp.maximum(xw[:B, Hp:] + b_ref[1:2, :Hp], 0.0)         # [B, Hp]

    # --- global_max_pool: chunked running max over node chunks --------------
    # Masked value 0.0 is an exact identity here because h_conv >= 0 post-ReLU
    # and every segment in the legal configuration is non-empty.
    pool = pool_ref[...]                                            # [B, NP] bf16
    n_chunks = NP // node_chunk
    h_pool = jnp.zeros((B, Hp), f32)
    for c in range(n_chunks):                                       # static trip count
        hc = h_conv[c * node_chunk:(c + 1) * node_chunk, :]         # [chunk, Hp]
        pc = pool[:, c * node_chunk:(c + 1) * node_chunk]           # [B, chunk]
        cand = jnp.where(pc[:, :, None] != 0, hc[None, :, :], 0.0)  # [B, chunk, Hp]
        h_pool = jnp.maximum(h_pool, jnp.max(cand, axis=1))         # [B, Hp]

    # --- lin1 on lane-concatenated [h_pool | h_lin]  (single K=2Hp dot) ------
    h_cat = jnp.concatenate([h_pool, h_lin], axis=1).astype(bf16)   # [B, 2Hp]
    h = jnp.maximum(jnp.dot(h_cat, w1_ref[...], preferred_element_type=f32)
                    + b_ref[2:3, :Hp], 0.0)                         # [B, Hp]

    # --- lin2 (lane-dense padded output) -------------------------------------
    out_ref[...] = (jnp.dot(h.astype(bf16), w2_ref[...],
                            preferred_element_type=f32)
                    + b_ref[3:4, :Cop])                             # [B, Cop]


def _full_spec(shape):
    nd = len(shape)
    return pl.BlockSpec(shape, lambda i, _nd=nd: (0,) * _nd)


def _round_up(v, m):
    return (v + m - 1) // m * m


def _pad2(a, shape):
    pads = [(0, t - s) for s, t in zip(a.shape, shape)]
    return jnp.pad(a, pads)


# ----------------------------------------------------------------------------
# Wrapper: jitted glue (adjacency / pool mask, weight transpose/pad/fuse) + call
# ----------------------------------------------------------------------------
@partial(jax.jit, static_argnames=("num_graphs",))
def gossipcop_forward(x, edge_index, batch, params, *, num_graphs):
    N, Cin = x.shape
    H = params["lin0_w"].shape[0]
    Cout = params["lin2_w"].shape[0]
    B = num_graphs
    assert B == N, "GossipCopModel.forward requires num_graphs == num_nodes"

    Cp = _round_up(Cin, LANE)
    Hp = _round_up(H, LANE)
    Cop = _round_up(Cout, LANE)
    Hmax = max(Hp, Cop)

    # Node-count padding: sublane aligned, and a multiple of the pooling chunk
    # when more than one chunk is needed.
    NP = _round_up(N, 8) if N <= NODE_CHUNK else _round_up(N, NODE_CHUNK)
    chunk = min(NODE_CHUNK, NP)

    # Exact {0,1} adjacency (dst row, src col) + separate f32 inverse degree.
    src, dst = edge_index[0], edge_index[1]
    A = jnp.zeros((N, N), jnp.float32).at[dst, src].add(1.0)
    deg = jnp.sum(A, axis=1, keepdims=True)
    inv_deg = _pad2(1.0 / jnp.maximum(deg, 1.0), (NP, 1))            # [NP, 1] f32
    adj = _pad2(A, (NP, NP)).astype(jnp.bfloat16)                    # exact in bf16

    # One-hot segment mask for global_max_pool, [B, NP] (graphs on sublanes).
    pool = (batch[None, :] == jnp.arange(B, dtype=batch.dtype)[:, None])
    pool = _pad2(pool.astype(jnp.bfloat16), (B, NP))                 # 0/1 exact

    # bf16 node features, lane-padded.
    x_p = _pad2(x, (NP, Cp)).astype(jnp.bfloat16)

    def padw(w_torch, rows, cols):               # torch layout [out, in] -> [in, out]
        return _pad2(w_torch.T, (rows, cols)).astype(jnp.bfloat16)

    wl = padw(params["sage_lin_l_w"], Cp, Hp)
    wr = padw(params["sage_lin_r_w"], Cp, Hp)
    w0 = padw(params["lin0_w"], Cp, Hp)
    wx = jnp.concatenate([wr, w0], axis=1)       # [Cp, 2Hp] fused x-LHS weights

    w1t = params["lin1_w"].T                     # [2H, H]
    w1 = jnp.concatenate(                        # [2Hp, Hp]: pool half | lin half
        [_pad2(w1t[:H], (Hp, Hp)), _pad2(w1t[H:], (Hp, Hp))],
        axis=0).astype(jnp.bfloat16)
    w2 = padw(params["lin2_w"], Hp, Cop)

    # Single f32 bias slab: row0=sage_lin_l_b, row1=lin0_b, row2=lin1_b, row3=lin2_b.
    bias = jnp.zeros((8, Hmax), jnp.float32)
    bias = bias.at[0, :H].set(params["sage_lin_l_b"])
    bias = bias.at[1, :H].set(params["lin0_b"])
    bias = bias.at[2, :H].set(params["lin1_b"])
    bias = bias.at[3, :Cout].set(params["lin2_b"])

    args = (x_p, adj, pool, inv_deg, wl, wx, w1, w2, bias)

    out_p = pl.pallas_call(
        partial(gossipcop_kernel, num_graphs=B, node_chunk=chunk),
        out_shape=jax.ShapeDtypeStruct((B, Cop), jnp.float32),
        grid=(1,),
        in_specs=[_full_spec(a.shape) for a in args],
        out_specs=_full_spec((B, Cop)),
        compiler_params=pltpu.CompilerParams(
            dimension_semantics=("arbitrary",)),
    )(*args)

    return out_p[:, :Cout]


# ----------------------------------------------------------------------------
# Deterministic parameter init (same shapes as the PyTorch module's __init__)
# ----------------------------------------------------------------------------
def init_params(key, in_channels, hidden_channels, out_channels):
    ks = jax.random.split(key, 9)
    s = 0.1
    n = lambda k, shape: s * jax.random.normal(k, shape, jnp.float32)
    return {
        "sage_lin_l_w": n(ks[0], (hidden_channels, in_channels)),
        "sage_lin_l_b": n(ks[1], (hidden_channels,)),
        "sage_lin_r_w": n(ks[2], (hidden_channels, in_channels)),
        "lin0_w": n(ks[3], (hidden_channels, in_channels)),
        "lin0_b": n(ks[4], (hidden_channels,)),
        "lin1_w": n(ks[5], (hidden_channels, 2 * hidden_channels)),
        "lin1_b": n(ks[6], (hidden_channels,)),
        "lin2_w": n(ks[7], (out_channels, hidden_channels)),
        "lin2_b": n(ks[8], (out_channels,)),
    }


# Pure-JAX f32 reference (mirrors the PyTorch forward) for a correctness check.
def reference(x, edge_index, batch, params, *, num_graphs):
    N = x.shape[0]
    src, dst = edge_index[0], edge_index[1]
    A = jnp.zeros((N, N), jnp.float32).at[dst, src].add(1.0)
    deg = jnp.sum(A, axis=1, keepdims=True)
    agg = (A / jnp.maximum(deg, 1.0)) @ x
    h_conv = jax.nn.relu(agg @ params["sage_lin_l_w"].T + params["sage_lin_l_b"]
                         + x @ params["sage_lin_r_w"].T)
    h_pool = jax.ops.segment_max(h_conv, batch, num_segments=num_graphs)
    h_lin = jax.nn.relu(x @ params["lin0_w"].T + params["lin0_b"])
    h = jnp.concatenate([h_pool, h_lin], axis=1)
    h = jax.nn.relu(h @ params["lin1_w"].T + params["lin1_b"])
    return h @ params["lin2_w"].T + params["lin2_b"]


if __name__ == "__main__":
    in_channels, hidden_channels, inter_channels, out_channels = 16, 32, 64, 2
    # (inter_channels is unused by the reference forward pass.)
    N = 8

    key = jax.random.PRNGKey(0)
    kx, kp = jax.random.split(key)
    x = jax.random.normal(kx, (N, in_channels), jnp.float32)

    # Bidirectional ring of edges over the N nodes.
    s = jnp.arange(N, dtype=jnp.int32)
    d = (s + 1) % N
    edge_index = jnp.stack([jnp.concatenate([s, d]), jnp.concatenate([d, s])])

    # Each node is its own graph (required by cat([h_pool, h_lin], dim=1)).
    batch = jnp.arange(N, dtype=jnp.int32)

    params = init_params(kp, in_channels, hidden_channels, out_channels)

    out = gossipcop_forward(x, edge_index, batch, params, num_graphs=N)
    out = jax.block_until_ready(out)

    ref = reference(x, edge_index, batch, params, num_graphs=N)
    assert out.shape == (N, out_channels)
    # Matmul operands are bf16 (f32 accumulation); allow bf16 rounding vs. the
    # pure-f32 reference (observed error ~1e-3 at these magnitudes).
    assert jnp.allclose(out, ref, atol=2e-2, rtol=2e-2), "mismatch vs JAX reference"

    print("KERNEL_OK")
</pallas_src>

<mosaic_0001>
module attributes {stable_mosaic.version = 11 : i64} {
  func.func private @main(%arg0: i32) attributes {dimension_semantics = [#tpu.dimension_semantics<core_parallel>], iteration_bounds = array<i64: 2>, tpu.core_type = #tpu.core_type<sc_scalar_subcore>, window_params = []} {
    return
  }
}

module attributes {stable_mosaic.version = 11 : i64} {
  func.func private @main(%arg0: i32) attributes {dimension_semantics = [#tpu.dimension_semantics<core_parallel>], iteration_bounds = array<i64: 2>, tpu.core_type = #tpu.core_type<sc_scalar_subcore>, window_params = []} {
    return
  }
}

module attributes {stable_mosaic.version = 11 : i64} {
  func.func @gossipcop_kernel(%arg0: i32, %arg1: memref<8x128xbf16, #tpu.memory_space<vmem>>, %arg2: memref<8x8xbf16, #tpu.memory_space<vmem>>, %arg3: memref<8x8xbf16, #tpu.memory_space<vmem>>, %arg4: memref<8x1xf32, #tpu.memory_space<vmem>>, %arg5: memref<128x128xbf16, #tpu.memory_space<vmem>>, %arg6: memref<128x256xbf16, #tpu.memory_space<vmem>>, %arg7: memref<256x128xbf16, #tpu.memory_space<vmem>>, %arg8: memref<128x128xbf16, #tpu.memory_space<vmem>>, %arg9: memref<8x128xf32, #tpu.memory_space<vmem>>, %arg10: memref<8x128xf32, #tpu.memory_space<vmem>>) attributes {dimension_semantics = [#tpu.dimension_semantics<arbitrary>], iteration_bounds = array<i64: 1>, scalar_prefetch = 0 : i64, scratch_operands = 0 : i64, tpu.core_type = #tpu.core_type<tc>, window_params = [{pipeline_mode = #tpu.pipeline_mode<synchronous>, transform_indices = @transform_0, window_bounds = array<i64: 8, 128>}, {pipeline_mode = #tpu.pipeline_mode<synchronous>, transform_indices = @transform_1, window_bounds = array<i64: 8, 8>}, {pipeline_mode = #tpu.pipeline_mode<synchronous>, transform_indices = @transform_2, window_bounds = array<i64: 8, 8>}, {pipeline_mode = #tpu.pipeline_mode<synchronous>, transform_indices = @transform_3, window_bounds = array<i64: 8, 1>}, {pipeline_mode = #tpu.pipeline_mode<synchronous>, transform_indices = @transform_4, window_bounds = array<i64: 128, 128>}, {pipeline_mode = #tpu.pipeline_mode<synchronous>, transform_indices = @transform_5, window_bounds = array<i64: 128, 256>}, {pipeline_mode = #tpu.pipeline_mode<synchronous>, transform_indices = @transform_6, window_bounds = array<i64: 256, 128>}, {pipeline_mode = #tpu.pipeline_mode<synchronous>, transform_indices = @transform_7, window_bounds = array<i64: 128, 128>}, {pipeline_mode = #tpu.pipeline_mode<synchronous>, transform_indices = @transform_8, window_bounds = array<i64: 8, 128>}, {pipeline_mode = #tpu.pipeline_mode<synchronous>, transform_indices = @transform_9, window_bounds = array<i64: 8, 128>}]} {
    %c0 = arith.constant 0 : index
    %c0_0 = arith.constant 0 : index
    %0 = vector.load %arg1[%c0, %c0_0] : memref<8x128xbf16, #tpu.memory_space<vmem>>, vector<8x128xbf16>
    %c0_1 = arith.constant 0 : index
    %c0_2 = arith.constant 0 : index
    %1 = vector.load %arg6[%c0_1, %c0_2] : memref<128x256xbf16, #tpu.memory_space<vmem>>, vector<128x256xbf16>
    %cst = arith.constant dense<0.000000e+00> : vector<8x256xf32>
    %2 = tpu.matmul %0, %1, %cst {dimension_numbers = #tpu.dot_dimension_numbers<[1], [0], [0], [1], [0, 0, 1, 1], [], []>} : vector<8x128xbf16>, vector<128x256xbf16>, vector<8x256xf32> -> vector<8x256xf32>
    %c0_3 = arith.constant 0 : index
    %c0_4 = arith.constant 0 : index
    %3 = vector.load %arg2[%c0_3, %c0_4] : memref<8x8xbf16, #tpu.memory_space<vmem>>, vector<8x8xbf16>
    %cst_5 = arith.constant dense<0.000000e+00> : vector<8x128xf32>
    %4 = tpu.matmul %3, %0, %cst_5 {dimension_numbers = #tpu.dot_dimension_numbers<[1], [0], [0], [1], [0, 0, 1, 1], [], []>} : vector<8x8xbf16>, vector<8x128xbf16>, vector<8x128xf32> -> vector<8x128xf32>
    %c0_6 = arith.constant 0 : index
    %c0_7 = arith.constant 0 : index
    %5 = vector.load %arg4[%c0_6, %c0_7] : memref<8x1xf32, #tpu.memory_space<vmem>>, vector<8x1xf32>
    %6 = vector.broadcast %5 : vector<8x1xf32> to vector<8x128xf32>
    %7 = arith.mulf %4, %6 : vector<8x128xf32>
    %8 = arith.truncf %7 : vector<8x128xf32> to vector<8x128xbf16>
    %c0_8 = arith.constant 0 : index
    %c0_9 = arith.constant 0 : index
    %9 = vector.load %arg5[%c0_8, %c0_9] : memref<128x128xbf16, #tpu.memory_space<vmem>>, vector<128x128xbf16>
    %cst_10 = arith.constant dense<0.000000e+00> : vector<8x128xf32>
    %10 = tpu.matmul %8, %9, %cst_10 {dimension_numbers = #tpu.dot_dimension_numbers<[1], [0], [0], [1], [0, 0, 1, 1], [], []>} : vector<8x128xbf16>, vector<128x128xbf16>, vector<8x128xf32> -> vector<8x128xf32>
    %11 = vector.extract_strided_slice %2 {offsets = [0, 0], sizes = [8, 128], strides = [1, 1]} : vector<8x256xf32> to vector<8x128xf32>
    %12 = arith.addf %10, %11 : vector<8x128xf32>
    %c0_11 = arith.constant 0 : index
    %c0_12 = arith.constant 0 : index
    %13 = vector.load %arg9[%c0_11, %c0_12] : memref<8x128xf32, #tpu.memory_space<vmem>>, vector<1x128xf32>
    %14 = vector.broadcast %13 : vector<1x128xf32> to vector<8x128xf32>
    %15 = arith.addf %12, %14 : vector<8x128xf32>
    %cst_13 = arith.constant 0.000000e+00 : f32
    %16 = vector.broadcast %cst_13 : f32 to vector<8x128xf32>
    %17 = arith.maximumf %15, %16 : vector<8x128xf32>
    %18 = vector.extract_strided_slice %2 {offsets = [0, 128], sizes = [8, 128], strides = [1, 1]} : vector<8x256xf32> to vector<8x128xf32>
    %c1 = arith.constant 1 : index
    %c0_14 = arith.constant 0 : index
    %19 = vector.load %arg9[%c1, %c0_14] : memref<8x128xf32, #tpu.memory_space<vmem>>, vector<1x128xf32>
    %20 = vector.broadcast %19 : vector<1x128xf32> to vector<8x128xf32>
    %21 = arith.addf %18, %20 : vector<8x128xf32>
    %cst_15 = arith.constant 0.000000e+00 : f32
    %22 = vector.broadcast %cst_15 : f32 to vector<8x128xf32>
    %23 = arith.maximumf %21, %22 : vector<8x128xf32>
    %c0_16 = arith.constant 0 : index
    %c0_17 = arith.constant 0 : index
    %24 = vector.load %arg3[%c0_16, %c0_17] : memref<8x8xbf16, #tpu.memory_space<vmem>>, vector<8x8xbf16>
    %cst_18 = arith.constant 0.000000e+00 : f32
    %25 = vector.broadcast %cst_18 : f32 to vector<8x128xf32>
    %26 = vector.shape_cast %24 : vector<8x8xbf16> to vector<8x8x1xbf16>
    %cst_19 = arith.constant 0.000000e+00 : bf16
    %27 = vector.broadcast %cst_19 : bf16 to vector<8x8x1xbf16>
    %28 = arith.cmpf one, %26, %27 : vector<8x8x1xbf16>
    %29 = vector.shape_cast %17 : vector<8x128xf32> to vector<1x8x128xf32>
    %cst_20 = arith.constant 0.000000e+00 : f32
    %30 = vector.shape_cast %28 : vector<8x8x1xi1> to vector<8x8x1xi1>
    %31 = vector.broadcast %30 : vector<8x8x1xi1> to vector<8x8x128xi1>
    %32 = vector.shape_cast %29 : vector<1x8x128xf32> to vector<1x8x128xf32>
    %33 = vector.broadcast %32 : vector<1x8x128xf32> to vector<8x8x128xf32>
    %34 = vector.broadcast %cst_20 : f32 to vector<8x8x128xf32>
    %35 = arith.select %31, %33, %34 : vector<8x8x128xi1>, vector<8x8x128xf32>
    %cst_21 = arith.constant dense<0xFF800000> : vector<8x128xf32>
    %36 = vector.multi_reduction <maximumf>, %35, %cst_21 [1] : vector<8x8x128xf32> to vector<8x128xf32>
    %37 = arith.maximumf %25, %36 : vector<8x128xf32>
    %38 = tpu.concatenate %37, %23 in 1 : vector<8x128xf32>, vector<8x128xf32> -> vector<8x256xf32>
    %39 = arith.truncf %38 : vector<8x256xf32> to vector<8x256xbf16>
    %c0_22 = arith.constant 0 : index
    %c0_23 = arith.constant 0 : index
    %40 = vector.load %arg7[%c0_22, %c0_23] : memref<256x128xbf16, #tpu.memory_space<vmem>>, vector<256x128xbf16>
    %cst_24 = arith.constant dense<0.000000e+00> : vector<8x128xf32>
    %41 = tpu.matmul %39, %40, %cst_24 {dimension_numbers = #tpu.dot_dimension_numbers<[1], [0], [0], [1], [0, 0, 1, 1], [], []>} : vector<8x256xbf16>, vector<256x128xbf16>, vector<8x128xf32> -> vector<8x128xf32>
    %c2 = arith.constant 2 : index
    %c0_25 = arith.constant 0 : index
    %42 = vector.load %arg9[%c2, %c0_25] : memref<8x128xf32, #tpu.memory_space<vmem>>, vector<1x128xf32>
    %43 = vector.broadcast %42 : vector<1x128xf32> to vector<8x128xf32>
    %44 = arith.addf %41, %43 : vector<8x128xf32>
    %cst_26 = arith.constant 0.000000e+00 : f32
    %45 = vector.broadcast %cst_26 : f32 to vector<8x128xf32>
    %46 = arith.maximumf %44, %45 : vector<8x128xf32>
    %47 = arith.truncf %46 : vector<8x128xf32> to vector<8x128xbf16>
    %c0_27 = arith.constant 0 : index
    %c0_28 = arith.constant 0 : index
    %48 = vector.load %arg8[%c0_27, %c0_28] : memref<128x128xbf16, #tpu.memory_space<vmem>>, vector<128x128xbf16>
    %cst_29 = arith.constant dense<0.000000e+00> : vector<8x128xf32>
    %49 = tpu.matmul %47, %48, %cst_29 {dimension_numbers = #tpu.dot_dimension_numbers<[1], [0], [0], [1], [0, 0, 1, 1], [], []>} : vector<8x128xbf16>, vector<128x128xbf16>, vector<8x128xf32> -> vector<8x128xf32>
    %c3 = arith.constant 3 : index
    %c0_30 = arith.constant 0 : index
    %50 = vector.load %arg9[%c3, %c0_30] : memref<8x128xf32, #tpu.memory_space<vmem>>, vector<1x128xf32>
    %51 = vector.broadcast %50 : vector<1x128xf32> to vector<8x128xf32>
    %52 = arith.addf %49, %51 : vector<8x128xf32>
    %c0_31 = arith.constant 0 : index
    %c0_32 = arith.constant 0 : index
    %53 = vector.load %arg10[%c0_31, %c0_32] : memref<8x128xf32, #tpu.memory_space<vmem>>, vector<8x128xf32>
    tpu.vector_store %arg10[%c0_31, %c0_32], %52 {strides = array<i32>} : memref<8x128xf32, #tpu.memory_space<vmem>>, vector<8x128xf32>,
    return
  }
  func.func @transform_0(%arg0: i32) -> (i32, i32) {
    %c0_i32 = arith.constant 0 : i32
    %c0_i32_0 = arith.constant 0 : i32
    %c0_i32_1 = arith.constant 0 : i32
    return %c0_i32, %c0_i32_0 : i32, i32
  }
  func.func @transform_1(%arg0: i32) -> (i32, i32) {
    %c0_i32 = arith.constant 0 : i32
    %c0_i32_0 = arith.constant 0 : i32
    %c0_i32_1 = arith.constant 0 : i32
    return %c0_i32, %c0_i32_0 : i32, i32
  }
  func.func @transform_2(%arg0: i32) -> (i32, i32) {
    %c0_i32 = arith.constant 0 : i32
    %c0_i32_0 = arith.constant 0 : i32
    %c0_i32_1 = arith.constant 0 : i32
    return %c0_i32, %c0_i32_0 : i32, i32
  }
  func.func @transform_3(%arg0: i32) -> (i32, i32) {
    %c0_i32 = arith.constant 0 : i32
    %c0_i32_0 = arith.constant 0 : i32
    %c0_i32_1 = arith.constant 0 : i32
    return %c0_i32, %c0_i32_0 : i32, i32
  }
  func.func @transform_4(%arg0: i32) -> (i32, i32) {
    %c0_i32 = arith.constant 0 : i32
    %c0_i32_0 = arith.constant 0 : i32
    %c0_i32_1 = arith.constant 0 : i32
    return %c0_i32, %c0_i32_0 : i32, i32
  }
  func.func @transform_5(%arg0: i32) -> (i32, i32) {
    %c0_i32 = arith.constant 0 : i32
    %c0_i32_0 = arith.constant 0 : i32
    %c0_i32_1 = arith.constant 0 : i32
    return %c0_i32, %c0_i32_0 : i32, i32
  }
  func.func @transform_6(%arg0: i32) -> (i32, i32) {
    %c0_i32 = arith.constant 0 : i32
    %c0_i32_0 = arith.constant 0 : i32
    %c0_i32_1 = arith.constant 0 : i32
    return %c0_i32, %c0_i32_0 : i32, i32
  }
  func.func @transform_7(%arg0: i32) -> (i32, i32) {
    %c0_i32 = arith.constant 0 : i32
    %c0_i32_0 = arith.constant 0 : i32
    %c0_i32_1 = arith.constant 0 : i32
    return %c0_i32, %c0_i32_0 : i32, i32
  }
  func.func @transform_8(%arg0: i32) -> (i32, i32) {
    %c0_i32 = arith.constant 0 : i32
    %c0_i32_0 = arith.constant 0 : i32
    %c0_i32_1 = arith.constant 0 : i32
    return %c0_i32, %c0_i32_0 : i32, i32
  }
  func.func @transform_9(%arg0: i32) -> (i32, i32) {
    %c0_i32 = arith.constant 0 : i32
    %c0_i32_0 = arith.constant 0 : i32
    %c0_i32_1 = arith.constant 0 : i32
    return %c0_i32, %c0_i32_0 : i32, i32
  }
}

</mosaic_0001>

<llo_original>
// kernel: gossipcop_forward.1
$region0: #{gossipcop_forward.1}
  #allocation0 [shape = 'u32[]', space=smem, size = 0x4, offset = 0x4, fixed_abs, tag = 'smem constant byte address 0x4 - core index']
  #allocation1 [shape = 'u32[144,128]{1,0:T(1,128)}', space=vmem, size = 0x12000, scoped, tag = 'internal scratch']
  %s0 = inlined_call_operand.vmem [shape: bf16[8,128], index: 0, kind: input, shape index: {}]
  %s1 = inlined_call_operand.vmem [shape: bf16[8,8], index: 1, kind: input, shape index: {}]
  %s2 = inlined_call_operand.vmem [shape: bf16[8,8], index: 2, kind: input, shape index: {}]
  %s3 = inlined_call_operand.vmem [shape: f32[8,1], index: 3, kind: input, shape index: {}]
  %s4 = inlined_call_operand.vmem [shape: bf16[128,128], index: 4, kind: input, shape index: {}]
  %s5 = inlined_call_operand.vmem [shape: bf16[128,256], index: 5, kind: input, shape index: {}]
  %s6 = inlined_call_operand.vmem [shape: bf16[256,128], index: 6, kind: input, shape index: {}]
  %s7 = inlined_call_operand.vmem [shape: bf16[128,128], index: 7, kind: input, shape index: {}]
  %s8 = inlined_call_operand.vmem [shape: f32[8,128], index: 8, kind: input, shape index: {}]
  %s9 = inlined_call_operand.vmem [shape: f32[8,128], index: 9, kind: output, shape index: {}]
  %s10 = sld [smem:[#allocation0]]
  $region46: #{gossipcop_forward.1} parent=0
    _
  %s12 = ssub.s32 1, %s10
  %s13 = scalar_select 0, %s12, %s10
  // Predicated region
  $region2: #{gossipcop_forward.1} parent=0 // pred_check
    _
  $region3: #{gossipcop_forward.1} parent=0 // pred_check_branch
    %15 = sbr.rel (0) target = $region5
  $region4: #{gossipcop_forward.1} parent=0 // pred_region
    _
  $region5: #{gossipcop_forward.1} parent=0 // pred_fallthru
    _
  // Predicated region
  $region6: #{gossipcop_forward.1} parent=0 // pred_check
    _
  $region7: #{gossipcop_forward.1} parent=0 // pred_check_branch
    %17 = sbr.rel (0) target = $region9
  $region8: #{gossipcop_forward.1} parent=0 // pred_region
    _
  $region9: #{gossipcop_forward.1} parent=0 // pred_fallthru
    _
  // Predicated region
  $region10: #{gossipcop_forward.1} parent=0 // pred_check
    _
  $region11: #{gossipcop_forward.1} parent=0 // pred_check_branch
    %19 = sbr.rel (0) target = $region13
  $region12: #{gossipcop_forward.1} parent=0 // pred_region
    _
  $region13: #{gossipcop_forward.1} parent=0 // pred_fallthru
    _
  // Predicated region
  $region14: #{gossipcop_forward.1} parent=0 // pred_check
    _
  $region15: #{gossipcop_forward.1} parent=0 // pred_check_branch
    %21 = sbr.rel (0) target = $region17
  $region16: #{gossipcop_forward.1} parent=0 // pred_region
    _
  $region17: #{gossipcop_forward.1} parent=0 // pred_fallthru
    _
  // Predicated region
  $region18: #{gossipcop_forward.1} parent=0 // pred_check
    _
  $region19: #{gossipcop_forward.1} parent=0 // pred_check_branch
    %23 = sbr.rel (0) target = $region21
  $region20: #{gossipcop_forward.1} parent=0 // pred_region
    _
  $region21: #{gossipcop_forward.1} parent=0 // pred_fallthru
    _
  // Predicated region
  $region22: #{gossipcop_forward.1} parent=0 // pred_check
    _
  $region23: #{gossipcop_forward.1} parent=0 // pred_check_branch
    %25 = sbr.rel (0) target = $region25
  $region24: #{gossipcop_forward.1} parent=0 // pred_region
    _
  $region25: #{gossipcop_forward.1} parent=0 // pred_fallthru
    _
  // Predicated region
  $region26: #{gossipcop_forward.1} parent=0 // pred_check
    _
  $region27: #{gossipcop_forward.1} parent=0 // pred_check_branch
    %27 = sbr.rel (0) target = $region29
  $region28: #{gossipcop_forward.1} parent=0 // pred_region
    _
  $region29: #{gossipcop_forward.1} parent=0 // pred_fallthru
    _
  // Predicated region
  $region30: #{gossipcop_forward.1} parent=0 // pred_check
    _
  $region31: #{gossipcop_forward.1} parent=0 // pred_check_branch
    %29 = sbr.rel (0) target = $region33
  $region32: #{gossipcop_forward.1} parent=0 // pred_region
    _
  $region33: #{gossipcop_forward.1} parent=0 // pred_fallthru
    _
  // Predicated region
  $region34: #{gossipcop_forward.1} parent=0 // pred_check
    _
  $region35: #{gossipcop_forward.1} parent=0 // pred_check_branch
    %31 = sbr.rel (0) target = $region37
  $region36: #{gossipcop_forward.1} parent=0 // pred_region
    _
  $region37: #{gossipcop_forward.1} parent=0 // pred_fallthru
    _
  %v35 = vld [vmem:[%s0] sm:$0xf]
  %v36 = vld [vmem:[%s5] sm:$0xff]
  %v37 = vld [vmem:[%s5 + $0x8] sm:$0xff]
  %v38 = vld [vmem:[%s5 + $0x10] sm:$0xff]
  %v39 = vld [vmem:[%s5 + $0x18] sm:$0xff]
  %v40 = vld [vmem:[%s5 + $0x20] sm:$0xff]
  %v41 = vld [vmem:[%s5 + $0x28] sm:$0xff]
  %v42 = vld [vmem:[%s5 + $0x30] sm:$0xff]
  %v43 = vld [vmem:[%s5 + $0x38] sm:$0xff]
  %v44 = vld [vmem:[%s5 + $0x40] sm:$0xff]
  %v45 = vld [vmem:[%s5 + $0x48] sm:$0xff]
  %v46 = vld [vmem:[%s5 + $0x50] sm:$0xff]
  %v47 = vld [vmem:[%s5 + $0x58] sm:$0xff]
  %v48 = vld [vmem:[%s5 + $0x60] sm:$0xff]
  %v49 = vld [vmem:[%s5 + $0x68] sm:$0xff]
  %v50 = vld [vmem:[%s5 + $0x70] sm:$0xff]
  %v51 = vld [vmem:[%s5 + $0x78] sm:$0xff]
  %v68 = vunpack.c.l.b16 %v36
  %v69 = vunpack.c.h.b16 %v36
  %v70 = vunpack.c.l.b16 %v37
  %v71 = vunpack.c.h.b16 %v37
  %v72 = vunpack.c.l.b16 %v38
  %v73 = vunpack.c.h.b16 %v38
  %v74 = vunpack.c.l.b16 %v39
  %v75 = vunpack.c.h.b16 %v39
  %v76 = vunpack.c.l.b16 %v40
  %v77 = vunpack.c.h.b16 %v40
  %v78 = vunpack.c.l.b16 %v41
  %v79 = vunpack.c.h.b16 %v41
  %v80 = vunpack.c.l.b16 %v42
  %v81 = vunpack.c.h.b16 %v42
  %v82 = vunpack.c.l.b16 %v43
  %v83 = vunpack.c.h.b16 %v43
  %v84 = vunpack.c.l.b16 %v44
  %v85 = vunpack.c.h.b16 %v44
  %v86 = vunpack.c.l.b16 %v45
  %v87 = vunpack.c.h.b16 %v45
  %v88 = vunpack.c.l.b16 %v46
  %v89 = vunpack.c.h.b16 %v46
  %v90 = vunpack.c.l.b16 %v47
  %v91 = vunpack.c.h.b16 %v47
  %v92 = vunpack.c.l.b16 %v48
  %v93 = vunpack.c.h.b16 %v48
  %v94 = vunpack.c.l.b16 %v49
  %v95 = vunpack.c.h.b16 %v49
  %v96 = vunpack.c.l.b16 %v50
  %v97 = vunpack.c.h.b16 %v50
  %v98 = vunpack.c.l.b16 %v51
  %v99 = vunpack.c.h.b16 %v51
  %v100 = vpack.c.b16 %v70, %v68
  %v101 = vpack.c.b16 %v71, %v69
  %v102 = vpack.c.b16 %v74, %v72
  %v103 = vpack.c.b16 %v75, %v73
  %v104 = vpack.c.b16 %v78, %v76
  %v105 = vpack.c.b16 %v79, %v77
  %v106 = vpack.c.b16 %v82, %v80
  %v107 = vpack.c.b16 %v83, %v81
  %v108 = vpack.c.b16 %v86, %v84
  %v109 = vpack.c.b16 %v87, %v85
  %v110 = vpack.c.b16 %v90, %v88
  %v111 = vpack.c.b16 %v91, %v89
  %v112 = vpack.c.b16 %v94, %v92
  %v113 = vpack.c.b16 %v95, %v93
  %v114 = vpack.c.b16 %v98, %v96
  %v115 = vpack.c.b16 %v99, %v97
  %132 = vmatprep.subr.bf16.mxu0 %v101
  %133 = vmatpush1.bf16.msra.mxu0 %v100
  %134 = vmatprep.subr.bf16.mxu0 %v103
  %135 = vmatpush1.bf16.msra.mxu0 %v102
  %136 = vmatprep.subr.bf16.mxu0 %v105
  %137 = vmatpush1.bf16.msra.mxu0 %v104
  %138 = vmatprep.subr.bf16.mxu0 %v107
  %139 = vmatpush1.bf16.msra.mxu0 %v106
  %140 = vmatprep.subr.bf16.mxu0 %v109
  %141 = vmatpush1.bf16.msra.mxu0 %v108
  %142 = vmatprep.subr.bf16.mxu0 %v111
  %143 = vmatpush1.bf16.msra.mxu0 %v110
  %144 = vmatprep.subr.bf16.mxu0 %v113
  %145 = vmatpush1.bf16.msra.mxu0 %v112
  %146 = vmatprep.subr.bf16.mxu0 %v115
  %147 = vmatpush1.bf16.msra.mxu0 %v114
  %148 = vmatprep.subr.bf16.mxu0 0
  %149 = vmatpush1.bf16.msra.mxu0 0
  %150 = vmatprep.subr.bf16.mxu0 0
  %151 = vmatpush1.bf16.msra.mxu0 0
  %152 = vmatprep.subr.bf16.mxu0 0
  %153 = vmatpush1.bf16.msra.mxu0 0
  %154 = vmatprep.subr.bf16.mxu0 0
  %155 = vmatpush1.bf16.msra.mxu0 0
  %156 = vmatprep.subr.bf16.mxu0 0
  %157 = vmatpush1.bf16.msra.mxu0 0
  %158 = vmatprep.subr.bf16.mxu0 0
  %159 = vmatpush1.bf16.msra.mxu0 0
  %160 = vmatprep.subr.bf16.mxu0 0
  %161 = vmatpush1.bf16.msra.mxu0 0
  %162 = vmatprep.subr.bf16.mxu0 0
  %163 = vmatpush1.bf16.msra.mxu0 0
  %164 = vmatprep.mubr.bf16.mxu0 0
  %165 = vmatmul.mubr.bf16.gmra.mrb[0].mxu0 %v35
  %v166 = vpop.f32.mrb[0].mxu0
  %v167 = vadd.f32 0.0, %v166
  %v168 = vpop.f32.mrb[0].mxu0
  %v169 = vadd.f32 0.0, %v168
  %v170 = vpop.f32.mrb[0].mxu0
  %v171 = vpop.f32.mrb[0].mxu0
  %172 = vdwg.mxu0
  %v173 = vld [vmem:[%s1] sm:$0xf]
  %vm174 = vcmask 64512
  %v176 = vsel %vm174, %v173, 0
  %vm178 = vcmask 1043456
  %v180 = vsel %vm178, %v35, 0
  %182 = vmatprep.subr.bf16.mxu0 0
  %183 = vmatpush1.bf16.msra.mxu0 %v180
  %184 = vmatprep.subr.bf16.mxu0 0
  %185 = vmatpush1.bf16.msra.mxu0 0
  %186 = vmatprep.subr.bf16.mxu0 0
  %187 = vmatpush1.bf16.msra.mxu0 0
  %188 = vmatprep.subr.bf16.mxu0 0
  %189 = vmatpush1.bf16.msra.mxu0 0
  %190 = vmatprep.subr.bf16.mxu0 0
  %191 = vmatpush1.bf16.msra.mxu0 0
  %192 = vmatprep.subr.bf16.mxu0 0
  %193 = vmatpush1.bf16.msra.mxu0 0
  %194 = vmatprep.subr.bf16.mxu0 0
  %195 = vmatpush1.bf16.msra.mxu0 0
  %196 = vmatprep.subr.bf16.mxu0 0
  %197 = vmatpush1.bf16.msra.mxu0 0
  %198 = vmatprep.subr.bf16.mxu0 0
  %199 = vmatpush1.bf16.msra.mxu0 0
  %200 = vmatprep.subr.bf16.mxu0 0
  %201 = vmatpush1.bf16.msra.mxu0 0
  %202 = vmatprep.subr.bf16.mxu0 0
  %203 = vmatpush1.bf16.msra.mxu0 0
  %204 = vmatprep.subr.bf16.mxu0 0
  %205 = vmatpush1.bf16.msra.mxu0 0
  %206 = vmatprep.subr.bf16.mxu0 0
  %207 = vmatpush1.bf16.msra.mxu0 0
  %208 = vmatprep.subr.bf16.mxu0 0
  %209 = vmatpush1.bf16.msra.mxu0 0
  %210 = vmatprep.subr.bf16.mxu0 0
  %211 = vmatpush1.bf16.msra.mxu0 0
  %212 = vmatprep.subr.bf16.mxu0 0
  %213 = vmatpush1.bf16.msra.mxu0 0
  %214 = vmatprep.mubr.bf16.mxu0 0
  %215 = vmatmul.mubr.bf16.gmra.mrb[0].mxu0 %v176
  %v216 = vpop.f32.mrb[0].mxu0
  %v217 = vadd.f32 0.0, %v216
  %v218 = vpop.f32.mrb[0].mxu0
  %v219 = vpop.f32.mrb[0].mxu0
  %v220 = vpop.f32.mrb[0].mxu0
  %221 = vdwg.mxu0
  %v222 = vld [vmem:[%s3] sm:$0xff]
  %224 = vset.pattern.permute.xlu0 0
  %225 = vperm.xlu0 %224, %v222
  %v226 = vpop.permute.xlu0 %225
  %v228 = vmul.f32 %v217, %v226
  %v229 = vpack.c.bf16 %v228, %v228
  %v230 = vld [vmem:[%s4] sm:$0xf]
  %v231 = vld [vmem:[%s4 + $0x4] sm:$0xf]
  %v232 = vld [vmem:[%s4 + $0x8] sm:$0xf]
  %v233 = vld [vmem:[%s4 + $0xc] sm:$0xf]
  %v234 = vld [vmem:[%s4 + $0x10] sm:$0xf]
  %v235 = vld [vmem:[%s4 + $0x14] sm:$0xf]
  %v236 = vld [vmem:[%s4 + $0x18] sm:$0xf]
  %v237 = vld [vmem:[%s4 + $0x1c] sm:$0xf]
  %v238 = vld [vmem:[%s4 + $0x20] sm:$0xf]
  %v239 = vld [vmem:[%s4 + $0x24] sm:$0xf]
  %v240 = vld [vmem:[%s4 + $0x28] sm:$0xf]
  %v241 = vld [vmem:[%s4 + $0x2c] sm:$0xf]
  %v242 = vld [vmem:[%s4 + $0x30] sm:$0xf]
  %v243 = vld [vmem:[%s4 + $0x34] sm:$0xf]
  %v244 = vld [vmem:[%s4 + $0x38] sm:$0xf]
  %v245 = vld [vmem:[%s4 + $0x3c] sm:$0xf]
  %v262 = vunpack.c.l.b16 %v230
  %v263 = vunpack.c.l.b16 %v231
  %v264 = vunpack.c.l.b16 %v232
  %v265 = vunpack.c.l.b16 %v233
  %v266 = vunpack.c.l.b16 %v234
  %v267 = vunpack.c.l.b16 %v235
  %v268 = vunpack.c.l.b16 %v236
  %v269 = vunpack.c.l.b16 %v237
  %v270 = vunpack.c.l.b16 %v238
  %v271 = vunpack.c.l.b16 %v239
  %v272 = vunpack.c.l.b16 %v240
  %v273 = vunpack.c.l.b16 %v241
  %v274 = vunpack.c.l.b16 %v242
  %v275 = vunpack.c.l.b16 %v243
  %v276 = vunpack.c.l.b16 %v244
  %v277 = vunpack.c.l.b16 %v245
  %v278 = vpack.c.b16 %v263, %v262
  %v279 = vpack.c.b16 %v265, %v264
  %v280 = vpack.c.b16 %v267, %v266
  %v281 = vpack.c.b16 %v269, %v268
  %v282 = vpack.c.b16 %v271, %v270
  %v283 = vpack.c.b16 %v273, %v272
  %v284 = vpack.c.b16 %v275, %v274
  %v285 = vpack.c.b16 %v277, %v276
  %294 = vmatprep.subr.bf16.mxu0 0
  %295 = vmatpush1.bf16.msra.mxu0 %v278
  %296 = vmatprep.subr.bf16.mxu0 0
  %297 = vmatpush1.bf16.msra.mxu0 %v279
  %298 = vmatprep.subr.bf16.mxu0 0
  %299 = vmatpush1.bf16.msra.mxu0 %v280
  %300 = vmatprep.subr.bf16.mxu0 0
  %301 = vmatpush1.bf16.msra.mxu0 %v281
  %302 = vmatprep.subr.bf16.mxu0 0
  %303 = vmatpush1.bf16.msra.mxu0 %v282
  %304 = vmatprep.subr.bf16.mxu0 0
  %305 = vmatpush1.bf16.msra.mxu0 %v283
  %306 = vmatprep.subr.bf16.mxu0 0
  %307 = vmatpush1.bf16.msra.mxu0 %v284
  %308 = vmatprep.subr.bf16.mxu0 0
  %309 = vmatpush1.bf16.msra.mxu0 %v285
  %310 = vmatprep.subr.bf16.mxu0 0
  %311 = vmatpush1.bf16.msra.mxu0 0
  %312 = vmatprep.subr.bf16.mxu0 0
  %313 = vmatpush1.bf16.msra.mxu0 0
  %314 = vmatprep.subr.bf16.mxu0 0
  %315 = vmatpush1.bf16.msra.mxu0 0
  %316 = vmatprep.subr.bf16.mxu0 0
  %317 = vmatpush1.bf16.msra.mxu0 0
  %318 = vmatprep.subr.bf16.mxu0 0
  %319 = vmatpush1.bf16.msra.mxu0 0
  %320 = vmatprep.subr.bf16.mxu0 0
  %321 = vmatpush1.bf16.msra.mxu0 0
  %322 = vmatprep.subr.bf16.mxu0 0
  %323 = vmatpush1.bf16.msra.mxu0 0
  %324 = vmatprep.subr.bf16.mxu0 0
  %325 = vmatpush1.bf16.msra.mxu0 0
  %326 = vmatprep.mubr.bf16.mxu0 0
  %327 = vmatmul.mubr.bf16.gmra.mrb[0].mxu0 %v229
  %v328 = vpop.f32.mrb[0].mxu0
  %v329 = vadd.f32 %v167, %v328
  %v330 = vpop.f32.mrb[0].mxu0
  %v331 = vpop.f32.mrb[0].mxu0
  %v332 = vpop.f32.mrb[0].mxu0
  %333 = vdwg.mxu0
  %v334 = vld [vmem:[%s8] sm:$0x1]
  %v335 = vlaneseq
  %v336 = vshrl.u32 %v335, 7
  %v337 = vsub.s32 0, %v336
  %v338 = vrot.slane %v334, %v337
  %v339 = vadd.f32 %v329, %v338
  %v340 = vmax.f32 %v339, 0.0
  %v341 = vld [vmem:[%s8 + $0x1] sm:$0x1]
  %v342 = vlaneseq
  %v343 = vshrl.u32 %v342, 7
  %v344 = vsub.s32 0, %v343
  %v345 = vrot.slane %v341, %v344
  %v346 = vadd.f32 %v169, %v345
  %v347 = vmax.f32 %v346, 0.0
  %v348 = vld [vmem:[%s2] sm:$0xf]
  %v350 = vpack.i.b16 %v348, %v348
  %v352 = vlaneseq
  %v353 = vshrl.u32 %v352, 7
  %v354 = vsub.s32 0, %v353
  %v355 = vrot.slane %v350, %v354
  %357 = vbcast.lane.c.b16.xlu0 %v355, 256
  %v358 = vpop.permute.xlu0 %357
  %v359 = vshrl.u32 %v348, 16
  %v360 = vpack.i.b16 %v359, %v359
  %v362 = vlaneseq
  %v363 = vshrl.u32 %v362, 7
  %v364 = vsub.s32 0, %v363
  %v365 = vrot.slane %v360, %v364
  %367 = vbcast.lane.c.b16.xlu0 %v365, 256
  %v368 = vpop.permute.xlu0 %367
  %v369 = vlaneseq
  %v370 = vshrl.u32 %v369, 7
  %v371 = vsub.s32 1, %v370
  %v372 = vrot.slane %v350, %v371
  %374 = vbcast.lane.c.b16.xlu0 %v372, 256
  %v375 = vpop.permute.xlu0 %374
  %v376 = vlaneseq
  %v377 = vshrl.u32 %v376, 7
  %v378 = vsub.s32 1, %v377
  %v379 = vrot.slane %v360, %v378
  %381 = vbcast.lane.c.b16.xlu0 %v379, 256
  %v382 = vpop.permute.xlu0 %381
  %v383 = vlaneseq
  %v384 = vshrl.u32 %v383, 7
  %v385 = vsub.s32 2, %v384
  %v386 = vrot.slane %v350, %v385
  %388 = vbcast.lane.c.b16.xlu0 %v386, 256
  %v389 = vpop.permute.xlu0 %388
  %v390 = vlaneseq
  %v391 = vshrl.u32 %v390, 7
  %v392 = vsub.s32 2, %v391
  %v393 = vrot.slane %v360, %v392
  %395 = vbcast.lane.c.b16.xlu0 %v393, 256
  %v396 = vpop.permute.xlu0 %395
  %v397 = vlaneseq
  %v398 = vshrl.u32 %v397, 7
  %v399 = vsub.s32 3, %v398
  %v400 = vrot.slane %v350, %v399
  %402 = vbcast.lane.c.b16.xlu0 %v400, 256
  %v403 = vpop.permute.xlu0 %402
  %v404 = vlaneseq
  %v405 = vshrl.u32 %v404, 7
  %v406 = vsub.s32 3, %v405
  %v407 = vrot.slane %v360, %v406
  %409 = vbcast.lane.c.b16.xlu0 %v407, 256
  %v410 = vpop.permute.xlu0 %409
  %vm411 = vcmp.ne.bf16.partialorder %v358, 0
  %vm412 = vcmp.ne.bf16.partialorder %v368, 0
  %vm413 = vcmp.ne.bf16.partialorder %v375, 0
  %vm414 = vcmp.ne.bf16.partialorder %v382, 0
  %vm415 = vcmp.ne.bf16.partialorder %v389, 0
  %vm416 = vcmp.ne.bf16.partialorder %v396, 0
  %vm417 = vcmp.ne.bf16.partialorder %v403, 0
  %vm418 = vcmp.ne.bf16.partialorder %v410, 0
  %v419 = vsel %vm411, 65537, 0
  %v420 = vsel %vm412, 65537, 0
  %v421 = vsel %vm413, 65537, 0
  %v422 = vsel %vm414, 65537, 0
  %v423 = vsel %vm415, 65537, 0
  %v424 = vsel %vm416, 65537, 0
  %v425 = vsel %vm417, 65537, 0
  %v426 = vsel %vm418, 65537, 0
  %v427 = vunpack.c.l.b16 %v419
  %v428 = vunpack.c.l.b16 %v420
  %v429 = vunpack.c.l.b16 %v421
  %v430 = vunpack.c.l.b16 %v422
  %v431 = vunpack.c.l.b16 %v423
  %v432 = vunpack.c.l.b16 %v424
  %v433 = vunpack.c.l.b16 %v425
  %v434 = vunpack.c.l.b16 %v426
  %vm435 = vcmp.ne.s32.totalorder %v427, 0
  %vm436 = vcmp.ne.s32.totalorder %v428, 0
  %vm437 = vcmp.ne.s32.totalorder %v429, 0
  %vm438 = vcmp.ne.s32.totalorder %v430, 0
  %vm439 = vcmp.ne.s32.totalorder %v431, 0
  %vm440 = vcmp.ne.s32.totalorder %v432, 0
  %vm441 = vcmp.ne.s32.totalorder %v433, 0
  %vm442 = vcmp.ne.s32.totalorder %v434, 0
  %v443 = vsel %vm435, 1, 0
  %v444 = vsel %vm436, 1, 0
  %v445 = vsel %vm437, 1, 0
  %v446 = vsel %vm438, 1, 0
  %v447 = vsel %vm439, 1, 0
  %v448 = vsel %vm440, 1, 0
  %v449 = vsel %vm441, 1, 0
  %v450 = vsel %vm442, 1, 0
  %451 = vset.pattern.permute.xlu0 0
  %452 = vperm.xlu0 %451, %v443
  %v453 = vpop.permute.xlu0 %452
  %454 = vset.pattern.permute.xlu0 0
  %455 = vperm.xlu0 %454, %v444
  %v456 = vpop.permute.xlu0 %455
  %457 = vset.pattern.permute.xlu0 0
  %458 = vperm.xlu0 %457, %v445
  %v459 = vpop.permute.xlu0 %458
  %460 = vset.pattern.permute.xlu0 0
  %461 = vperm.xlu0 %460, %v446
  %v462 = vpop.permute.xlu0 %461
  %463 = vset.pattern.permute.xlu0 0
  %464 = vperm.xlu0 %463, %v447
  %v465 = vpop.permute.xlu0 %464
  %466 = vset.pattern.permute.xlu0 0
  %467 = vperm.xlu0 %466, %v448
  %v468 = vpop.permute.xlu0 %467
  %469 = vset.pattern.permute.xlu0 0
  %470 = vperm.xlu0 %469, %v449
  %v471 = vpop.permute.xlu0 %470
  %472 = vset.pattern.permute.xlu0 0
  %473 = vperm.xlu0 %472, %v450
  %v474 = vpop.permute.xlu0 %473
  %vm475 = vcmp.eq.s32.totalorder %v453, 1
  %vm476 = vcmp.eq.s32.totalorder %v456, 1
  %vm477 = vcmp.eq.s32.totalorder %v459, 1
  %vm478 = vcmp.eq.s32.totalorder %v462, 1
  %vm479 = vcmp.eq.s32.totalorder %v465, 1
  %vm480 = vcmp.eq.s32.totalorder %v468, 1
  %vm481 = vcmp.eq.s32.totalorder %v471, 1
  %vm482 = vcmp.eq.s32.totalorder %v474, 1
  %v483 = vsel %vm475, %v340, 0.0
  %v484 = vsel %vm476, %v340, 0.0
  %v485 = vsel %vm477, %v340, 0.0
  %v486 = vsel %vm478, %v340, 0.0
  %v487 = vsel %vm479, %v340, 0.0
  %v488 = vsel %vm480, %v340, 0.0
  %v489 = vsel %vm481, %v340, 0.0
  %v490 = vsel %vm482, %v340, 0.0
  %v491 = vrot.slane %v483, 4
  %v492 = vmax.f32 %v483, %v491
  %v493 = vrot.slane %v492, 2
  %v494 = vmax.f32 %v492, %v493
  %v495 = vrot.slane %v494, 1
  %v496 = vmax.f32 %v494, %v495
  %v497 = vrot.slane %v484, 4
  %v498 = vmax.f32 %v484, %v497
  %v499 = vrot.slane %v498, 2
  %v500 = vmax.f32 %v498, %v499
  %v501 = vrot.slane %v500, 1
  %v502 = vmax.f32 %v500, %v501
  %v503 = vrot.slane %v485, 4
  %v504 = vmax.f32 %v485, %v503
  %v505 = vrot.slane %v504, 2
  %v506 = vmax.f32 %v504, %v505
  %v507 = vrot.slane %v506, 1
  %v508 = vmax.f32 %v506, %v507
  %v509 = vrot.slane %v486, 4
  %v510 = vmax.f32 %v486, %v509
  %v511 = vrot.slane %v510, 2
  %v512 = vmax.f32 %v510, %v511
  %v513 = vrot.slane %v512, 1
  %v514 = vmax.f32 %v512, %v513
  %v515 = vrot.slane %v487, 4
  %v516 = vmax.f32 %v487, %v515
  %v517 = vrot.slane %v516, 2
  %v518 = vmax.f32 %v516, %v517
  %v519 = vrot.slane %v518, 1
  %v520 = vmax.f32 %v518, %v519
  %v521 = vrot.slane %v488, 4
  %v522 = vmax.f32 %v488, %v521
  %v523 = vrot.slane %v522, 2
  %v524 = vmax.f32 %v522, %v523
  %v525 = vrot.slane %v524, 1
  %v526 = vmax.f32 %v524, %v525
  %v527 = vrot.slane %v489, 4
  %v528 = vmax.f32 %v489, %v527
  %v529 = vrot.slane %v528, 2
  %v530 = vmax.f32 %v528, %v529
  %v531 = vrot.slane %v530, 1
  %v532 = vmax.f32 %v530, %v531
  %v533 = vrot.slane %v490, 4
  %v534 = vmax.f32 %v490, %v533
  %v535 = vrot.slane %v534, 2
  %v536 = vmax.f32 %v534, %v535
  %v537 = vrot.slane %v536, 1
  %v538 = vmax.f32 %v536, %v537
  %v539 = vmax.f32 %v496, 0.0
  %v540 = vmax.f32 %v502, 0.0
  %v541 = vmax.f32 %v508, 0.0
  %v542 = vmax.f32 %v514, 0.0
  %v543 = vmax.f32 %v520, 0.0
  %v544 = vmax.f32 %v526, 0.0
  %v545 = vmax.f32 %v532, 0.0
  %v546 = vmax.f32 %v538, 0.0
  %vm555 = vcmask 1041409
  %v556 = vsel %vm555, %v540, %v539
  %vm557 = vcmask 1042434
  %v558 = vsel %vm557, %v541, %v556
  %vm559 = vcmask 1043459
  %v560 = vsel %vm559, %v542, %v558
  %vm561 = vcmask 1044484
  %v562 = vsel %vm561, %v543, %v560
  %vm563 = vcmask 1045509
  %v564 = vsel %vm563, %v544, %v562
  %vm565 = vcmask 1046534
  %v566 = vsel %vm565, %v545, %v564
  %vm567 = vcmask 1047559
  %v568 = vsel %vm567, %v546, %v566
  %v570 = vpack.c.bf16 %v568, %v568
  %v571 = vpack.c.bf16 %v347, %v347
  %v572 = vld [vmem:[%s6] sm:$0xf]
  %v573 = vld [vmem:[%s6 + $0x4] sm:$0xf]
  %v574 = vld [vmem:[%s6 + $0x8] sm:$0xf]
  %v575 = vld [vmem:[%s6 + $0xc] sm:$0xf]
  %v576 = vld [vmem:[%s6 + $0x10] sm:$0xf]
  %v577 = vld [vmem:[%s6 + $0x14] sm:$0xf]
  %v578 = vld [vmem:[%s6 + $0x18] sm:$0xf]
  %v579 = vld [vmem:[%s6 + $0x1c] sm:$0xf]
  %v580 = vld [vmem:[%s6 + $0x20] sm:$0xf]
  %v581 = vld [vmem:[%s6 + $0x24] sm:$0xf]
  %v582 = vld [vmem:[%s6 + $0x28] sm:$0xf]
  %v583 = vld [vmem:[%s6 + $0x2c] sm:$0xf]
  %v584 = vld [vmem:[%s6 + $0x30] sm:$0xf]
  %v585 = vld [vmem:[%s6 + $0x34] sm:$0xf]
  %v586 = vld [vmem:[%s6 + $0x38] sm:$0xf]
  %v587 = vld [vmem:[%s6 + $0x3c] sm:$0xf]
  %v588 = vld [vmem:[%s6 + $0x40] sm:$0xf]
  %v589 = vld [vmem:[%s6 + $0x44] sm:$0xf]
  %v590 = vld [vmem:[%s6 + $0x48] sm:$0xf]
  %v591 = vld [vmem:[%s6 + $0x4c] sm:$0xf]
  %v592 = vld [vmem:[%s6 + $0x50] sm:$0xf]
  %v593 = vld [vmem:[%s6 + $0x54] sm:$0xf]
  %v594 = vld [vmem:[%s6 + $0x58] sm:$0xf]
  %v595 = vld [vmem:[%s6 + $0x5c] sm:$0xf]
  %v596 = vld [vmem:[%s6 + $0x60] sm:$0xf]
  %v597 = vld [vmem:[%s6 + $0x64] sm:$0xf]
  %v598 = vld [vmem:[%s6 + $0x68] sm:$0xf]
  %v599 = vld [vmem:[%s6 + $0x6c] sm:$0xf]
  %v600 = vld [vmem:[%s6 + $0x70] sm:$0xf]
  %v601 = vld [vmem:[%s6 + $0x74] sm:$0xf]
  %v602 = vld [vmem:[%s6 + $0x78] sm:$0xf]
  %v603 = vld [vmem:[%s6 + $0x7c] sm:$0xf]
  %v604 = vld [vmem:[%s8 + $0x2] sm:$0x1]
  %v605 = vlaneseq
  %v606 = vshrl.u32 %v605, 7
  %v607 = vsub.s32 0, %v606
  %v608 = vrot.slane %v604, %v607
  %v641 = vunpack.c.l.b16 %v572
  %v642 = vunpack.c.l.b16 %v573
  %v643 = vunpack.c.l.b16 %v574
  %v644 = vunpack.c.l.b16 %v575
  %v645 = vunpack.c.l.b16 %v576
  %v646 = vunpack.c.l.b16 %v577
  %v647 = vunpack.c.l.b16 %v578
  %v648 = vunpack.c.l.b16 %v579
  %v649 = vunpack.c.l.b16 %v580
  %v650 = vunpack.c.l.b16 %v581
  %v651 = vunpack.c.l.b16 %v582
  %v652 = vunpack.c.l.b16 %v583
  %v653 = vunpack.c.l.b16 %v584
  %v654 = vunpack.c.l.b16 %v585
  %v655 = vunpack.c.l.b16 %v586
  %v656 = vunpack.c.l.b16 %v587
  %v657 = vunpack.c.l.b16 %v588
  %v658 = vunpack.c.l.b16 %v589
  %v659 = vunpack.c.l.b16 %v590
  %v660 = vunpack.c.l.b16 %v591
  %v661 = vunpack.c.l.b16 %v592
  %v662 = vunpack.c.l.b16 %v593
  %v663 = vunpack.c.l.b16 %v594
  %v664 = vunpack.c.l.b16 %v595
  %v665 = vunpack.c.l.b16 %v596
  %v666 = vunpack.c.l.b16 %v597
  %v667 = vunpack.c.l.b16 %v598
  %v668 = vunpack.c.l.b16 %v599
  %v669 = vunpack.c.l.b16 %v600
  %v670 = vunpack.c.l.b16 %v601
  %v671 = vunpack.c.l.b16 %v602
  %v672 = vunpack.c.l.b16 %v603
  %v673 = vpack.c.b16 %v642, %v641
  %v674 = vpack.c.b16 %v644, %v643
  %v675 = vpack.c.b16 %v646, %v645
  %v676 = vpack.c.b16 %v648, %v647
  %v677 = vpack.c.b16 %v650, %v649
  %v678 = vpack.c.b16 %v652, %v651
  %v679 = vpack.c.b16 %v654, %v653
  %v680 = vpack.c.b16 %v656, %v655
  %v681 = vpack.c.b16 %v658, %v657
  %v682 = vpack.c.b16 %v660, %v659
  %v683 = vpack.c.b16 %v662, %v661
  %v684 = vpack.c.b16 %v664, %v663
  %v685 = vpack.c.b16 %v666, %v665
  %v686 = vpack.c.b16 %v668, %v667
  %v687 = vpack.c.b16 %v670, %v669
  %v688 = vpack.c.b16 %v672, %v671
  %705 = vmatprep.subr.bf16.mxu0 0
  %706 = vmatpush1.bf16.msra.mxu0 %v673
  %707 = vmatprep.subr.bf16.mxu0 0
  %708 = vmatpush1.bf16.msra.mxu0 %v674
  %709 = vmatprep.subr.bf16.mxu0 0
  %710 = vmatpush1.bf16.msra.mxu0 %v675
  %711 = vmatprep.subr.bf16.mxu0 0
  %712 = vmatpush1.bf16.msra.mxu0 %v676
  %713 = vmatprep.subr.bf16.mxu0 0
  %714 = vmatpush1.bf16.msra.mxu0 %v677
  %715 = vmatprep.subr.bf16.mxu0 0
  %716 = vmatpush1.bf16.msra.mxu0 %v678
  %717 = vmatprep.subr.bf16.mxu0 0
  %718 = vmatpush1.bf16.msra.mxu0 %v679
  %719 = vmatprep.subr.bf16.mxu0 0
  %720 = vmatpush1.bf16.msra.mxu0 %v680
  %721 = vmatprep.subr.bf16.mxu0 0
  %722 = vmatpush1.bf16.msra.mxu0 %v681
  %723 = vmatprep.subr.bf16.mxu0 0
  %724 = vmatpush1.bf16.msra.mxu0 %v682
  %725 = vmatprep.subr.bf16.mxu0 0
  %726 = vmatpush1.bf16.msra.mxu0 %v683
  %727 = vmatprep.subr.bf16.mxu0 0
  %728 = vmatpush1.bf16.msra.mxu0 %v684
  %729 = vmatprep.subr.bf16.mxu0 0
  %730 = vmatpush1.bf16.msra.mxu0 %v685
  %731 = vmatprep.subr.bf16.mxu0 0
  %732 = vmatpush1.bf16.msra.mxu0 %v686
  %733 = vmatprep.subr.bf16.mxu0 0
  %734 = vmatpush1.bf16.msra.mxu0 %v687
  %735 = vmatprep.subr.bf16.mxu0 0
  %736 = vmatpush1.bf16.msra.mxu0 %v688
  %737 = vmatprep.mubr.bf16.mxu0 %v571
  %738 = vmatmul.mubr.bf16.gmra.mrb[0].mxu0 %v570
  %v739 = vpop.f32.mrb[0].mxu0
  %v740 = vadd.f32 %v608, %v739
  %v741 = vpop.f32.mrb[0].mxu0
  %v742 = vpop.f32.mrb[0].mxu0
  %v743 = vpop.f32.mrb[0].mxu0
  %744 = vdwg.mxu0
  %v745 = vmax.f32 %v740, 0.0
  %v746 = vpack.c.bf16 %v745, %v745
  %v747 = vld [vmem:[%s7] sm:$0xf]
  %v748 = vld [vmem:[%s7 + $0x4] sm:$0xf]
  %v749 = vld [vmem:[%s7 + $0x8] sm:$0xf]
  %v750 = vld [vmem:[%s7 + $0xc] sm:$0xf]
  %v751 = vld [vmem:[%s7 + $0x10] sm:$0xf]
  %v752 = vld [vmem:[%s7 + $0x14] sm:$0xf]
  %v753 = vld [vmem:[%s7 + $0x18] sm:$0xf]
  %v754 = vld [vmem:[%s7 + $0x1c] sm:$0xf]
  %v755 = vld [vmem:[%s7 + $0x20] sm:$0xf]
  %v756 = vld [vmem:[%s7 + $0x24] sm:$0xf]
  %v757 = vld [vmem:[%s7 + $0x28] sm:$0xf]
  %v758 = vld [vmem:[%s7 + $0x2c] sm:$0xf]
  %v759 = vld [vmem:[%s7 + $0x30] sm:$0xf]
  %v760 = vld [vmem:[%s7 + $0x34] sm:$0xf]
  %v761 = vld [vmem:[%s7 + $0x38] sm:$0xf]
  %v762 = vld [vmem:[%s7 + $0x3c] sm:$0xf]
  %v763 = vld [vmem:[%s8 + $0x3] sm:$0x1]
  %v764 = vlaneseq
  %v765 = vshrl.u32 %v764, 7
  %v766 = vsub.s32 0, %v765
  %v767 = vrot.slane %v763, %v766
  %v784 = vunpack.c.l.b16 %v747
  %v785 = vunpack.c.l.b16 %v748
  %v786 = vunpack.c.l.b16 %v749
  %v787 = vunpack.c.l.b16 %v750
  %v788 = vunpack.c.l.b16 %v751
  %v789 = vunpack.c.l.b16 %v752
  %v790 = vunpack.c.l.b16 %v753
  %v791 = vunpack.c.l.b16 %v754
  %v792 = vunpack.c.l.b16 %v755
  %v793 = vunpack.c.l.b16 %v756
  %v794 = vunpack.c.l.b16 %v757
  %v795 = vunpack.c.l.b16 %v758
  %v796 = vunpack.c.l.b16 %v759
  %v797 = vunpack.c.l.b16 %v760
  %v798 = vunpack.c.l.b16 %v761
  %v799 = vunpack.c.l.b16 %v762
  %v800 = vpack.c.b16 %v785, %v784
  %v801 = vpack.c.b16 %v787, %v786
  %v802 = vpack.c.b16 %v789, %v788
  %v803 = vpack.c.b16 %v791, %v790
  %v804 = vpack.c.b16 %v793, %v792
  %v805 = vpack.c.b16 %v795, %v794
  %v806 = vpack.c.b16 %v797, %v796
  %v807 = vpack.c.b16 %v799, %v798
  %816 = vmatprep.subr.bf16.mxu0 0
  %817 = vmatpush1.bf16.msra.mxu0 %v800
  %818 = vmatprep.subr.bf16.mxu0 0
  %819 = vmatpush1.bf16.msra.mxu0 %v801
  %820 = vmatprep.subr.bf16.mxu0 0
  %821 = vmatpush1.bf16.msra.mxu0 %v802
  %822 = vmatprep.subr.bf16.mxu0 0
  %823 = vmatpush1.bf16.msra.mxu0 %v803
  %824 = vmatprep.subr.bf16.mxu0 0
  %825 = vmatpush1.bf16.msra.mxu0 %v804
  %826 = vmatprep.subr.bf16.mxu0 0
  %827 = vmatpush1.bf16.msra.mxu0 %v805
  %828 = vmatprep.subr.bf16.mxu0 0
  %829 = vmatpush1.bf16.msra.mxu0 %v806
  %830 = vmatprep.subr.bf16.mxu0 0
  %831 = vmatpush1.bf16.msra.mxu0 %v807
  %832 = vmatprep.subr.bf16.mxu0 0
  %833 = vmatpush1.bf16.msra.mxu0 0
  %834 = vmatprep.subr.bf16.mxu0 0
  %835 = vmatpush1.bf16.msra.mxu0 0
  %836 = vmatprep.subr.bf16.mxu0 0
  %837 = vmatpush1.bf16.msra.mxu0 0
  %838 = vmatprep.subr.bf16.mxu0 0
  %839 = vmatpush1.bf16.msra.mxu0 0
  %840 = vmatprep.subr.bf16.mxu0 0
  %841 = vmatpush1.bf16.msra.mxu0 0
  %842 = vmatprep.subr.bf16.mxu0 0
  %843 = vmatpush1.bf16.msra.mxu0 0
  %844 = vmatprep.subr.bf16.mxu0 0
  %845 = vmatpush1.bf16.msra.mxu0 0
  %846 = vmatprep.subr.bf16.mxu0 0
  %847 = vmatpush1.bf16.msra.mxu0 0
  %848 = vmatprep.mubr.bf16.mxu0 0
  %849 = vmatmul.mubr.bf16.gmra.mrb[0].mxu0 %v746
  %v850 = vpop.f32.mrb[0].mxu0
  %v851 = vadd.f32 %v767, %v850
  %v852 = vpop.f32.mrb[0].mxu0
  %v853 = vpop.f32.mrb[0].mxu0
  %v854 = vpop.f32.mrb[0].mxu0
  %855 = vdwg.mxu0
  %856 = vst [vmem:[%s9] sm:$0xff] %v851
  // Predicated region
  $region38: #{gossipcop_forward.1} parent=0 // pred_check
    _
  $region39: #{gossipcop_forward.1} parent=0 // pred_check_branch
    %858 = sbr.rel (0) target = $region41
  $region40: #{gossipcop_forward.1} parent=0 // pred_region
    _
  $region41: #{gossipcop_forward.1} parent=0 // pred_fallthru
    _
  // Predicated region
  $region42: #{gossipcop_forward.1} parent=0 // pred_check
    _
  $region43: #{gossipcop_forward.1} parent=0 // pred_check_branch
    %860 = sbr.rel (0) target = $region45
  $region44: #{gossipcop_forward.1} parent=0 // pred_region
    _
  $region45: #{gossipcop_forward.1} parent=0 // pred_fallthru
    _

</llo_original>
